<compile_context>
chip_gen: v7x
topology: tpu7x:2x2x1
jax: 0.10.0
libtpu: 0.0.40
codegen_flags: <defaults>
</compile_context>

<pallas_src>
import functools

import jax
import jax.numpy as jnp
from jax import lax
from jax.experimental import pallas as pl
from jax.experimental.pallas import tpu as pltpu


def _gru_chunk_kernel(gi_ref, whh_ref, bhh_ref, out_ref, h_scratch,
                      *, hidden_size, chunk_len):
    """One grid step = one (batch-chunk, time-chunk).

    gi_ref   : (TS, BB, 3H) bf16  precomputed x @ W_ih^T + b_ih (time-major)
    whh_ref  : (H, 3H)      bf16  resident recurrent weight (transposed)
    bhh_ref  : (1, 3H)      f32   resident recurrent bias
    out_ref  : (TS, BB, H)        time-major output block
    h_scratch: (BB, H)      f32   recurrent state, persists across time chunks

    Invariant: the time-chunk axis MUST stay the innermost ("arbitrary") grid
    axis so h_scratch is re-zeroed at c == 0 before each batch chunk's time
    sweep — state cannot leak across batch chunks.
    """
    c = pl.program_id(1)                 # time-chunk index (sequential)

    @pl.when(c == 0)
    def _():
        h_scratch[...] = jnp.zeros_like(h_scratch)

    H = hidden_size
    BB = h_scratch.shape[0]

    whh = whh_ref[...]                                    # (H, 3H) bf16, hoisted
    # Hoisted bias broadcast: one broadcast per chunk, not per timestep.
    bhh = jnp.broadcast_to(bhh_ref[...].astype(jnp.float32), (BB, 3 * H))

    def step(i, h):
        gi = gi_ref[i].astype(jnp.float32)                # (BB, 3H)
        # bf16 x bf16 MXU matmul, f32 accumulate (serial critical path).
        gh = jnp.dot(h.astype(jnp.bfloat16), whh,
                     preferred_element_type=jnp.float32) + bhh
        # TODO(synk): pad H to a multiple of 128 in production so these gate
        # slices are lane-aligned views instead of cross-lane relayouts.
        r = jax.nn.sigmoid(gi[:, 0:H] + gh[:, 0:H])
        z = jax.nn.sigmoid(gi[:, H:2 * H] + gh[:, H:2 * H])
        n = jnp.tanh(gi[:, 2 * H:3 * H] + r * gh[:, 2 * H:3 * H])
        h_new = (1.0 - z) * n + z * h
        out_ref[i] = h_new.astype(out_ref.dtype)          # full (BB, H) store
        return h_new

    h = lax.fori_loop(0, chunk_len, step, h_scratch[...], unroll=True)
    h_scratch[...] = h                                    # one writeback/chunk


def _num_tensorcores():
    """Best-effort TensorCore count (1 on v5e/v6e, 2 on v7x); defaults to 1."""
    try:
        info = pltpu.get_tpu_info()
    except Exception:
        return 1
    for attr in ("num_cores", "num_tensorcores", "tensorcore_count",
                 "cores_per_chip", "core_count"):
        v = getattr(info, attr, None)
        if isinstance(v, int) and v >= 1:
            return v
    return 1


def encoder_rnn_forward(x_btI, w_ih, w_hh, b_ih, b_hh, *, max_chunk=16):
    """GRU forward matching nn.GRU(input_size, hidden_size, batch_first=True).

    x_btI : (B, T, I)   batch_first input
    w_ih  : (3H, I)     torch weight_ih_l0
    w_hh  : (3H, H)     torch weight_hh_l0
    b_ih  : (3H,)
    b_hh  : (3H,)
    Returns (output (B, T, H), hidden (1, B, H)).
    """
    B, T, I = x_btI.shape
    H = w_hh.shape[1]
    dtype = x_btI.dtype

    # --- Input projection for ALL timesteps as one parallel matmul, fused
    # with the batch_first -> time-major transpose; b_ih folded in here. -----
    gi = jnp.einsum('bti,gi->tbg',
                    x_btI.astype(jnp.float32),
                    w_ih.astype(jnp.float32),
                    preferred_element_type=jnp.float32)           # (T, B, 3H)
    gi = gi + b_ih.reshape(1, 1, 3 * H).astype(jnp.float32)
    gi = gi.astype(jnp.bfloat16)        # dominant HBM stream: halve traffic/VMEM

    # --- Time chunking: static unroll length inside the kernel. -------------
    TS = T if T <= max_chunk else max_chunk
    nc = -(-T // TS)
    T_pad = nc * TS
    if T_pad != T:
        gi = jnp.pad(gi, ((0, T_pad - T), (0, 0), (0, 0)))

    # --- Batch chunking: only with >1 TensorCore (v7x). On single-TC chips a
    # batch split just doubles the number of serial recurrent GEMMs. ---------
    num_tc = _num_tensorcores()
    BB = B // 2 if (num_tc >= 2 and B % 16 == 0) else B
    nb = B // BB

    whh_T = jnp.transpose(w_hh).astype(jnp.bfloat16)              # (H, 3H) bf16
    bhh = b_hh.reshape(1, 3 * H).astype(jnp.float32)

    kernel = functools.partial(_gru_chunk_kernel, hidden_size=H, chunk_len=TS)

    # Explicit VMEM budget from actual block sizes (+ headroom), clamped
    # below v7x's 64 MiB physical VMEM.
    blk_bytes = (2 * TS * BB * 3 * H * gi.dtype.itemsize          # gi dbl-buf
                 + 2 * TS * BB * H * jnp.dtype(dtype).itemsize    # out dbl-buf
                 + 2 * (H * 3 * H * 2 + 3 * H * 4)                # weights
                 + BB * H * 4)                                    # h_scratch
    vmem_limit = int(min(max(blk_bytes + (4 << 20), 32 << 20), 64 << 20))

    out_tm = pl.pallas_call(
        kernel,
        out_shape=jax.ShapeDtypeStruct((T_pad, B, H), dtype),     # time-major
        grid_spec=pltpu.PrefetchScalarGridSpec(
            num_scalar_prefetch=0,
            grid=(nb, nc),
            in_specs=[
                pl.BlockSpec((TS, BB, 3 * H), lambda b, c: (c, b, 0)),  # gi chunk
                # TODO(synk): mark the two resident specs with
                # pipeline_mode=pl.Buffered(1) once single-buffered inputs are
                # supported by the deployed jax, to drop the redundant second
                # weight buffer and free VMEM for a larger gi tile.
                pl.BlockSpec((H, 3 * H), lambda b, c: (0, 0)),          # W_hh^T
                pl.BlockSpec((1, 3 * H), lambda b, c: (0, 0)),          # b_hh
            ],
            out_specs=pl.BlockSpec((TS, BB, H), lambda b, c: (c, b, 0)),
            scratch_shapes=[pltpu.VMEM((BB, H), jnp.float32)],          # state
        ),
        compiler_params=pltpu.CompilerParams(
            dimension_semantics=("parallel", "arbitrary"),  # batch ∥, time seq
            vmem_limit_bytes=vmem_limit,
        ),
    )(gi, whh_T, bhh)

    output = jnp.transpose(out_tm[:T], (1, 0, 2))                 # batch_first
    hidden = out_tm[T - 1][None]                                  # (1, B, H)
    return output, hidden


def _gru_reference(x_btI, w_ih, w_hh, b_ih, b_hh):
    """Pure-JAX f32 reference (matches torch.nn.GRU, batch_first=True)."""
    B, T, I = x_btI.shape
    H = w_hh.shape[1]

    def step(h, x_t):
        gi = x_t @ w_ih.T + b_ih
        gh = h @ w_hh.T + b_hh
        i_r, i_z, i_n = gi[:, :H], gi[:, H:2 * H], gi[:, 2 * H:]
        h_r, h_z, h_n = gh[:, :H], gh[:, H:2 * H], gh[:, 2 * H:]
        r = jax.nn.sigmoid(i_r + h_r)
        z = jax.nn.sigmoid(i_z + h_z)
        n = jnp.tanh(i_n + r * h_n)
        h_new = (1.0 - z) * n + z * h
        return h_new, h_new

    h0 = jnp.zeros((B, H), x_btI.dtype)
    h_last, outs = lax.scan(step, h0, jnp.transpose(x_btI, (1, 0, 2)))
    return jnp.transpose(outs, (1, 0, 2)), h_last[None]


if __name__ == "__main__":
    # Small shapes consistent with EncoderRNN(input_size, hidden_size):
    B, T, input_size, hidden_size = 2, 8, 16, 32

    key = jax.random.PRNGKey(0)
    k_x, k_wih, k_whh, k_bih, k_bhh = jax.random.split(key, 5)

    # PyTorch GRU default init: U(-1/sqrt(H), 1/sqrt(H)).
    bound = 1.0 / jnp.sqrt(jnp.float32(hidden_size))
    x = jax.random.normal(k_x, (B, T, input_size), dtype=jnp.float32)
    w_ih = jax.random.uniform(k_wih, (3 * hidden_size, input_size),
                              minval=-bound, maxval=bound, dtype=jnp.float32)
    w_hh = jax.random.uniform(k_whh, (3 * hidden_size, hidden_size),
                              minval=-bound, maxval=bound, dtype=jnp.float32)
    b_ih = jax.random.uniform(k_bih, (3 * hidden_size,),
                              minval=-bound, maxval=bound, dtype=jnp.float32)
    b_hh = jax.random.uniform(k_bhh, (3 * hidden_size,),
                              minval=-bound, maxval=bound, dtype=jnp.float32)

    output, hidden = jax.block_until_ready(
        encoder_rnn_forward(x, w_ih, w_hh, b_ih, b_hh))

    ref_out, ref_hid = _gru_reference(x, w_ih, w_hh, b_ih, b_hh)
    assert output.shape == (B, T, hidden_size)
    assert hidden.shape == (1, B, hidden_size)
    # bf16 gi stream + bf16 MXU operands on the recurrent GEMM (f32 gate math)
    # -> loosened tolerance vs. the all-f32 reference.
    assert jnp.allclose(output, ref_out, atol=3e-2, rtol=3e-2)
    assert jnp.allclose(hidden, ref_hid, atol=3e-2, rtol=3e-2)

    print("KERNEL_OK")
</pallas_src>

<mosaic_0001>
module attributes {stable_mosaic.version = 11 : i64} {
  func.func @_gru_chunk_kernel(%arg0: i32, %arg1: i32, %arg2: memref<8x2x96xbf16, #tpu.memory_space<vmem>>, %arg3: memref<32x96xbf16, #tpu.memory_space<vmem>>, %arg4: memref<1x96xf32, #tpu.memory_space<vmem>>, %arg5: memref<8x2x32xf32, #tpu.memory_space<vmem>>, %arg6: memref<2x32xf32, #tpu.memory_space<vmem>>) attributes {dimension_semantics = [#tpu.dimension_semantics<parallel>, #tpu.dimension_semantics<arbitrary>], iteration_bounds = array<i64: 1, 1>, scalar_prefetch = 0 : i64, scratch_operands = 1 : i64, tpu.core_type = #tpu.core_type<tc>, window_params = [{transform_indices = @transform_0, window_bounds = array<i64: 8, 2, 96>}, {pipeline_mode = #tpu.pipeline_mode<synchronous>, transform_indices = @transform_1, window_bounds = array<i64: 32, 96>}, {pipeline_mode = #tpu.pipeline_mode<synchronous>, transform_indices = @transform_2, window_bounds = array<i64: 1, 96>}, {transform_indices = @transform_3, window_bounds = array<i64: 8, 2, 32>}]} {
    %c0_i32 = arith.constant 0 : i32
    %0 = arith.cmpi eq, %arg1, %c0_i32 : i32
    %1 = arith.extui %0 : i1 to i32
    %c0_i32_0 = arith.constant 0 : i32
    %2 = arith.cmpi ne, %1, %c0_i32_0 : i32
    scf.if %2 {
      %cst_72 = arith.constant 0.000000e+00 : f32
      %305 = vector.broadcast %cst_72 : f32 to vector<2x32xf32>
      %c0_73 = arith.constant 0 : index
      %c0_74 = arith.constant 0 : index
      %306 = vector.load %arg6[%c0_73, %c0_74] : memref<2x32xf32, #tpu.memory_space<vmem>>, vector<2x32xf32>
      tpu.vector_store %arg6[%c0_73, %c0_74], %305 {strides = array<i32>} : memref<2x32xf32, #tpu.memory_space<vmem>>, vector<2x32xf32>,
    } else {
    }
    %c0 = arith.constant 0 : index
    %c0_1 = arith.constant 0 : index
    %3 = vector.load %arg3[%c0, %c0_1] : memref<32x96xbf16, #tpu.memory_space<vmem>>, vector<32x96xbf16>
    %c0_2 = arith.constant 0 : index
    %c0_3 = arith.constant 0 : index
    %4 = vector.load %arg4[%c0_2, %c0_3] : memref<1x96xf32, #tpu.memory_space<vmem>>, vector<1x96xf32>
    %5 = vector.shape_cast %4 : vector<1x96xf32> to vector<1x96xf32>
    %6 = vector.broadcast %5 : vector<1x96xf32> to vector<2x96xf32>
    %c0_4 = arith.constant 0 : index
    %c0_5 = arith.constant 0 : index
    %7 = vector.load %arg6[%c0_4, %c0_5] : memref<2x32xf32, #tpu.memory_space<vmem>>, vector<2x32xf32>
    %c0_i32_6 = arith.constant 0 : i32
    %8 = arith.index_cast %c0_i32_6 : i32 to index
    %c0_7 = arith.constant 0 : index
    %c0_8 = arith.constant 0 : index
    %9 = vector.load %arg2[%8, %c0_7, %c0_8] : memref<8x2x96xbf16, #tpu.memory_space<vmem>>, vector<1x2x96xbf16>
    %10 = vector.shape_cast %9 : vector<1x2x96xbf16> to vector<2x96xbf16>
    %11 = arith.extf %10 : vector<2x96xbf16> to vector<2x96xf32>
    %12 = arith.truncf %7 : vector<2x32xf32> to vector<2x32xbf16>
    %cst = arith.constant dense<0.000000e+00> : vector<2x96xf32>
    %13 = tpu.matmul %12, %3, %cst {dimension_numbers = #tpu.dot_dimension_numbers<[1], [0], [0], [1], [0, 0, 1, 1], [], []>} : vector<2x32xbf16>, vector<32x96xbf16>, vector<2x96xf32> -> vector<2x96xf32>
    %14 = arith.addf %13, %6 : vector<2x96xf32>
    %15 = vector.extract_strided_slice %11 {offsets = [0, 0], sizes = [2, 32], strides = [1, 1]} : vector<2x96xf32> to vector<2x32xf32>
    %16 = vector.extract_strided_slice %14 {offsets = [0, 0], sizes = [2, 32], strides = [1, 1]} : vector<2x96xf32> to vector<2x32xf32>
    %17 = arith.addf %15, %16 : vector<2x32xf32>
    %18 = arith.negf %17 : vector<2x32xf32>
    %19 = math.exp %18 : vector<2x32xf32>
    %cst_9 = arith.constant 1.000000e+00 : f32
    %20 = vector.broadcast %cst_9 : f32 to vector<2x32xf32>
    %21 = arith.addf %20, %19 : vector<2x32xf32>
    %22 = arith.divf %20, %21 : vector<2x32xf32>
    %23 = vector.extract_strided_slice %11 {offsets = [0, 32], sizes = [2, 32], strides = [1, 1]} : vector<2x96xf32> to vector<2x32xf32>
    %24 = vector.extract_strided_slice %14 {offsets = [0, 32], sizes = [2, 32], strides = [1, 1]} : vector<2x96xf32> to vector<2x32xf32>
    %25 = arith.addf %23, %24 : vector<2x32xf32>
    %26 = arith.negf %25 : vector<2x32xf32>
    %27 = math.exp %26 : vector<2x32xf32>
    %cst_10 = arith.constant 1.000000e+00 : f32
    %28 = vector.broadcast %cst_10 : f32 to vector<2x32xf32>
    %29 = arith.addf %28, %27 : vector<2x32xf32>
    %30 = arith.divf %28, %29 : vector<2x32xf32>
    %31 = vector.extract_strided_slice %11 {offsets = [0, 64], sizes = [2, 32], strides = [1, 1]} : vector<2x96xf32> to vector<2x32xf32>
    %32 = vector.extract_strided_slice %14 {offsets = [0, 64], sizes = [2, 32], strides = [1, 1]} : vector<2x96xf32> to vector<2x32xf32>
    %33 = arith.mulf %22, %32 : vector<2x32xf32>
    %34 = arith.addf %31, %33 : vector<2x32xf32>
    %35 = math.tanh %34 : vector<2x32xf32>
    %cst_11 = arith.constant 1.000000e+00 : f32
    %36 = vector.broadcast %cst_11 : f32 to vector<2x32xf32>
    %37 = arith.subf %36, %30 : vector<2x32xf32>
    %38 = arith.mulf %37, %35 : vector<2x32xf32>
    %39 = arith.mulf %30, %7 : vector<2x32xf32>
    %40 = arith.addf %38, %39 : vector<2x32xf32>
    %41 = arith.index_cast %c0_i32_6 : i32 to index
    %c0_12 = arith.constant 0 : index
    %c0_13 = arith.constant 0 : index
    %42 = vector.load %arg5[%41, %c0_12, %c0_13] : memref<8x2x32xf32, #tpu.memory_space<vmem>>, vector<1x2x32xf32>
    %43 = vector.shape_cast %42 : vector<1x2x32xf32> to vector<2x32xf32>
    %44 = vector.shape_cast %40 : vector<2x32xf32> to vector<1x2x32xf32>
    tpu.vector_store %arg5[%41, %c0_12, %c0_13], %44 {strides = array<i32>} : memref<8x2x32xf32, #tpu.memory_space<vmem>>, vector<1x2x32xf32>,
    %c1_i32 = arith.constant 1 : i32
    %45 = arith.index_cast %c1_i32 : i32 to index
    %c0_14 = arith.constant 0 : index
    %c0_15 = arith.constant 0 : index
    %46 = vector.load %arg2[%45, %c0_14, %c0_15] : memref<8x2x96xbf16, #tpu.memory_space<vmem>>, vector<1x2x96xbf16>
    %47 = vector.shape_cast %46 : vector<1x2x96xbf16> to vector<2x96xbf16>
    %48 = arith.extf %47 : vector<2x96xbf16> to vector<2x96xf32>
    %49 = arith.truncf %40 : vector<2x32xf32> to vector<2x32xbf16>
    %cst_16 = arith.constant dense<0.000000e+00> : vector<2x96xf32>
    %50 = tpu.matmul %49, %3, %cst_16 {dimension_numbers = #tpu.dot_dimension_numbers<[1], [0], [0], [1], [0, 0, 1, 1], [], []>} : vector<2x32xbf16>, vector<32x96xbf16>, vector<2x96xf32> -> vector<2x96xf32>
    %51 = arith.addf %50, %6 : vector<2x96xf32>
    %52 = vector.extract_strided_slice %48 {offsets = [0, 0], sizes = [2, 32], strides = [1, 1]} : vector<2x96xf32> to vector<2x32xf32>
    %53 = vector.extract_strided_slice %51 {offsets = [0, 0], sizes = [2, 32], strides = [1, 1]} : vector<2x96xf32> to vector<2x32xf32>
    %54 = arith.addf %52, %53 : vector<2x32xf32>
    %55 = arith.negf %54 : vector<2x32xf32>
    %56 = math.exp %55 : vector<2x32xf32>
    %cst_17 = arith.constant 1.000000e+00 : f32
    %57 = vector.broadcast %cst_17 : f32 to vector<2x32xf32>
    %58 = arith.addf %57, %56 : vector<2x32xf32>
    %59 = arith.divf %57, %58 : vector<2x32xf32>
    %60 = vector.extract_strided_slice %48 {offsets = [0, 32], sizes = [2, 32], strides = [1, 1]} : vector<2x96xf32> to vector<2x32xf32>
    %61 = vector.extract_strided_slice %51 {offsets = [0, 32], sizes = [2, 32], strides = [1, 1]} : vector<2x96xf32> to vector<2x32xf32>
    %62 = arith.addf %60, %61 : vector<2x32xf32>
    %63 = arith.negf %62 : vector<2x32xf32>
    %64 = math.exp %63 : vector<2x32xf32>
    %cst_18 = arith.constant 1.000000e+00 : f32
    %65 = vector.broadcast %cst_18 : f32 to vector<2x32xf32>
    %66 = arith.addf %65, %64 : vector<2x32xf32>
    %67 = arith.divf %65, %66 : vector<2x32xf32>
    %68 = vector.extract_strided_slice %48 {offsets = [0, 64], sizes = [2, 32], strides = [1, 1]} : vector<2x96xf32> to vector<2x32xf32>
    %69 = vector.extract_strided_slice %51 {offsets = [0, 64], sizes = [2, 32], strides = [1, 1]} : vector<2x96xf32> to vector<2x32xf32>
    %70 = arith.mulf %59, %69 : vector<2x32xf32>
    %71 = arith.addf %68, %70 : vector<2x32xf32>
    %72 = math.tanh %71 : vector<2x32xf32>
    %cst_19 = arith.constant 1.000000e+00 : f32
    %73 = vector.broadcast %cst_19 : f32 to vector<2x32xf32>
    %74 = arith.subf %73, %67 : vector<2x32xf32>
    %75 = arith.mulf %74, %72 : vector<2x32xf32>
    %76 = arith.mulf %67, %40 : vector<2x32xf32>
    %77 = arith.addf %75, %76 : vector<2x32xf32>
    %78 = arith.index_cast %c1_i32 : i32 to index
    %c0_20 = arith.constant 0 : index
    %c0_21 = arith.constant 0 : index
    %79 = vector.load %arg5[%78, %c0_20, %c0_21] : memref<8x2x32xf32, #tpu.memory_space<vmem>>, vector<1x2x32xf32>
    %80 = vector.shape_cast %79 : vector<1x2x32xf32> to vector<2x32xf32>
    %81 = vector.shape_cast %77 : vector<2x32xf32> to vector<1x2x32xf32>
    tpu.vector_store %arg5[%78, %c0_20, %c0_21], %81 {strides = array<i32>} : memref<8x2x32xf32, #tpu.memory_space<vmem>>, vector<1x2x32xf32>,
    %c2_i32 = arith.constant 2 : i32
    %82 = arith.index_cast %c2_i32 : i32 to index
    %c0_22 = arith.constant 0 : index
    %c0_23 = arith.constant 0 : index
    %83 = vector.load %arg2[%82, %c0_22, %c0_23] : memref<8x2x96xbf16, #tpu.memory_space<vmem>>, vector<1x2x96xbf16>
    %84 = vector.shape_cast %83 : vector<1x2x96xbf16> to vector<2x96xbf16>
    %85 = arith.extf %84 : vector<2x96xbf16> to vector<2x96xf32>
    %86 = arith.truncf %77 : vector<2x32xf32> to vector<2x32xbf16>
    %cst_24 = arith.constant dense<0.000000e+00> : vector<2x96xf32>
    %87 = tpu.matmul %86, %3, %cst_24 {dimension_numbers = #tpu.dot_dimension_numbers<[1], [0], [0], [1], [0, 0, 1, 1], [], []>} : vector<2x32xbf16>, vector<32x96xbf16>, vector<2x96xf32> -> vector<2x96xf32>
    %88 = arith.addf %87, %6 : vector<2x96xf32>
    %89 = vector.extract_strided_slice %85 {offsets = [0, 0], sizes = [2, 32], strides = [1, 1]} : vector<2x96xf32> to vector<2x32xf32>
    %90 = vector.extract_strided_slice %88 {offsets = [0, 0], sizes = [2, 32], strides = [1, 1]} : vector<2x96xf32> to vector<2x32xf32>
    %91 = arith.addf %89, %90 : vector<2x32xf32>
    %92 = arith.negf %91 : vector<2x32xf32>
    %93 = math.exp %92 : vector<2x32xf32>
    %cst_25 = arith.constant 1.000000e+00 : f32
    %94 = vector.broadcast %cst_25 : f32 to vector<2x32xf32>
    %95 = arith.addf %94, %93 : vector<2x32xf32>
    %96 = arith.divf %94, %95 : vector<2x32xf32>
    %97 = vector.extract_strided_slice %85 {offsets = [0, 32], sizes = [2, 32], strides = [1, 1]} : vector<2x96xf32> to vector<2x32xf32>
    %98 = vector.extract_strided_slice %88 {offsets = [0, 32], sizes = [2, 32], strides = [1, 1]} : vector<2x96xf32> to vector<2x32xf32>
    %99 = arith.addf %97, %98 : vector<2x32xf32>
    %100 = arith.negf %99 : vector<2x32xf32>
    %101 = math.exp %100 : vector<2x32xf32>
    %cst_26 = arith.constant 1.000000e+00 : f32
    %102 = vector.broadcast %cst_26 : f32 to vector<2x32xf32>
    %103 = arith.addf %102, %101 : vector<2x32xf32>
    %104 = arith.divf %102, %103 : vector<2x32xf32>
    %105 = vector.extract_strided_slice %85 {offsets = [0, 64], sizes = [2, 32], strides = [1, 1]} : vector<2x96xf32> to vector<2x32xf32>
    %106 = vector.extract_strided_slice %88 {offsets = [0, 64], sizes = [2, 32], strides = [1, 1]} : vector<2x96xf32> to vector<2x32xf32>
    %107 = arith.mulf %96, %106 : vector<2x32xf32>
    %108 = arith.addf %105, %107 : vector<2x32xf32>
    %109 = math.tanh %108 : vector<2x32xf32>
    %cst_27 = arith.constant 1.000000e+00 : f32
    %110 = vector.broadcast %cst_27 : f32 to vector<2x32xf32>
    %111 = arith.subf %110, %104 : vector<2x32xf32>
    %112 = arith.mulf %111, %109 : vector<2x32xf32>
    %113 = arith.mulf %104, %77 : vector<2x32xf32>
    %114 = arith.addf %112, %113 : vector<2x32xf32>
    %115 = arith.index_cast %c2_i32 : i32 to index
    %c0_28 = arith.constant 0 : index
    %c0_29 = arith.constant 0 : index
    %116 = vector.load %arg5[%115, %c0_28, %c0_29] : memref<8x2x32xf32, #tpu.memory_space<vmem>>, vector<1x2x32xf32>
    %117 = vector.shape_cast %116 : vector<1x2x32xf32> to vector<2x32xf32>
    %118 = vector.shape_cast %114 : vector<2x32xf32> to vector<1x2x32xf32>
    tpu.vector_store %arg5[%115, %c0_28, %c0_29], %118 {strides = array<i32>} : memref<8x2x32xf32, #tpu.memory_space<vmem>>, vector<1x2x32xf32>,
    %c3_i32 = arith.constant 3 : i32
    %119 = arith.index_cast %c3_i32 : i32 to index
    %c0_30 = arith.constant 0 : index
    %c0_31 = arith.constant 0 : index
    %120 = vector.load %arg2[%119, %c0_30, %c0_31] : memref<8x2x96xbf16, #tpu.memory_space<vmem>>, vector<1x2x96xbf16>
    %121 = vector.shape_cast %120 : vector<1x2x96xbf16> to vector<2x96xbf16>
    %122 = arith.extf %121 : vector<2x96xbf16> to vector<2x96xf32>
    %123 = arith.truncf %114 : vector<2x32xf32> to vector<2x32xbf16>
    %cst_32 = arith.constant dense<0.000000e+00> : vector<2x96xf32>
    %124 = tpu.matmul %123, %3, %cst_32 {dimension_numbers = #tpu.dot_dimension_numbers<[1], [0], [0], [1], [0, 0, 1, 1], [], []>} : vector<2x32xbf16>, vector<32x96xbf16>, vector<2x96xf32> -> vector<2x96xf32>
    %125 = arith.addf %124, %6 : vector<2x96xf32>
    %126 = vector.extract_strided_slice %122 {offsets = [0, 0], sizes = [2, 32], strides = [1, 1]} : vector<2x96xf32> to vector<2x32xf32>
    %127 = vector.extract_strided_slice %125 {offsets = [0, 0], sizes = [2, 32], strides = [1, 1]} : vector<2x96xf32> to vector<2x32xf32>
    %128 = arith.addf %126, %127 : vector<2x32xf32>
    %129 = arith.negf %128 : vector<2x32xf32>
    %130 = math.exp %129 : vector<2x32xf32>
    %cst_33 = arith.constant 1.000000e+00 : f32
    %131 = vector.broadcast %cst_33 : f32 to vector<2x32xf32>
    %132 = arith.addf %131, %130 : vector<2x32xf32>
    %133 = arith.divf %131, %132 : vector<2x32xf32>
    %134 = vector.extract_strided_slice %122 {offsets = [0, 32], sizes = [2, 32], strides = [1, 1]} : vector<2x96xf32> to vector<2x32xf32>
    %135 = vector.extract_strided_slice %125 {offsets = [0, 32], sizes = [2, 32], strides = [1, 1]} : vector<2x96xf32> to vector<2x32xf32>
    %136 = arith.addf %134, %135 : vector<2x32xf32>
    %137 = arith.negf %136 : vector<2x32xf32>
    %138 = math.exp %137 : vector<2x32xf32>
    %cst_34 = arith.constant 1.000000e+00 : f32
    %139 = vector.broadcast %cst_34 : f32 to vector<2x32xf32>
    %140 = arith.addf %139, %138 : vector<2x32xf32>
    %141 = arith.divf %139, %140 : vector<2x32xf32>
    %142 = vector.extract_strided_slice %122 {offsets = [0, 64], sizes = [2, 32], strides = [1, 1]} : vector<2x96xf32> to vector<2x32xf32>
    %143 = vector.extract_strided_slice %125 {offsets = [0, 64], sizes = [2, 32], strides = [1, 1]} : vector<2x96xf32> to vector<2x32xf32>
    %144 = arith.mulf %133, %143 : vector<2x32xf32>
    %145 = arith.addf %142, %144 : vector<2x32xf32>
    %146 = math.tanh %145 : vector<2x32xf32>
    %cst_35 = arith.constant 1.000000e+00 : f32
    %147 = vector.broadcast %cst_35 : f32 to vector<2x32xf32>
    %148 = arith.subf %147, %141 : vector<2x32xf32>
    %149 = arith.mulf %148, %146 : vector<2x32xf32>
    %150 = arith.mulf %141, %114 : vector<2x32xf32>
    %151 = arith.addf %149, %150 : vector<2x32xf32>
    %152 = arith.index_cast %c3_i32 : i32 to index
    %c0_36 = arith.constant 0 : index
    %c0_37 = arith.constant 0 : index
    %153 = vector.load %arg5[%152, %c0_36, %c0_37] : memref<8x2x32xf32, #tpu.memory_space<vmem>>, vector<1x2x32xf32>
    %154 = vector.shape_cast %153 : vector<1x2x32xf32> to vector<2x32xf32>
    %155 = vector.shape_cast %151 : vector<2x32xf32> to vector<1x2x32xf32>
    tpu.vector_store %arg5[%152, %c0_36, %c0_37], %155 {strides = array<i32>} : memref<8x2x32xf32, #tpu.memory_space<vmem>>, vector<1x2x32xf32>,
    %c4_i32 = arith.constant 4 : i32
    %156 = arith.index_cast %c4_i32 : i32 to index
    %c0_38 = arith.constant 0 : index
    %c0_39 = arith.constant 0 : index
    %157 = vector.load %arg2[%156, %c0_38, %c0_39] : memref<8x2x96xbf16, #tpu.memory_space<vmem>>, vector<1x2x96xbf16>
    %158 = vector.shape_cast %157 : vector<1x2x96xbf16> to vector<2x96xbf16>
    %159 = arith.extf %158 : vector<2x96xbf16> to vector<2x96xf32>
    %160 = arith.truncf %151 : vector<2x32xf32> to vector<2x32xbf16>
    %cst_40 = arith.constant dense<0.000000e+00> : vector<2x96xf32>
    %161 = tpu.matmul %160, %3, %cst_40 {dimension_numbers = #tpu.dot_dimension_numbers<[1], [0], [0], [1], [0, 0, 1, 1], [], []>} : vector<2x32xbf16>, vector<32x96xbf16>, vector<2x96xf32> -> vector<2x96xf32>
    %162 = arith.addf %161, %6 : vector<2x96xf32>
    %163 = vector.extract_strided_slice %159 {offsets = [0, 0], sizes = [2, 32], strides = [1, 1]} : vector<2x96xf32> to vector<2x32xf32>
    %164 = vector.extract_strided_slice %162 {offsets = [0, 0], sizes = [2, 32], strides = [1, 1]} : vector<2x96xf32> to vector<2x32xf32>
    %165 = arith.addf %163, %164 : vector<2x32xf32>
    %166 = arith.negf %165 : vector<2x32xf32>
    %167 = math.exp %166 : vector<2x32xf32>
    %cst_41 = arith.constant 1.000000e+00 : f32
    %168 = vector.broadcast %cst_41 : f32 to vector<2x32xf32>
    %169 = arith.addf %168, %167 : vector<2x32xf32>
    %170 = arith.divf %168, %169 : vector<2x32xf32>
    %171 = vector.extract_strided_slice %159 {offsets = [0, 32], sizes = [2, 32], strides = [1, 1]} : vector<2x96xf32> to vector<2x32xf32>
    %172 = vector.extract_strided_slice %162 {offsets = [0, 32], sizes = [2, 32], strides = [1, 1]} : vector<2x96xf32> to vector<2x32xf32>
    %173 = arith.addf %171, %172 : vector<2x32xf32>
    %174 = arith.negf %173 : vector<2x32xf32>
    %175 = math.exp %174 : vector<2x32xf32>
    %cst_42 = arith.constant 1.000000e+00 : f32
    %176 = vector.broadcast %cst_42 : f32 to vector<2x32xf32>
    %177 = arith.addf %176, %175 : vector<2x32xf32>
    %178 = arith.divf %176, %177 : vector<2x32xf32>
    %179 = vector.extract_strided_slice %159 {offsets = [0, 64], sizes = [2, 32], strides = [1, 1]} : vector<2x96xf32> to vector<2x32xf32>
    %180 = vector.extract_strided_slice %162 {offsets = [0, 64], sizes = [2, 32], strides = [1, 1]} : vector<2x96xf32> to vector<2x32xf32>
    %181 = arith.mulf %170, %180 : vector<2x32xf32>
    %182 = arith.addf %179, %181 : vector<2x32xf32>
    %183 = math.tanh %182 : vector<2x32xf32>
    %cst_43 = arith.constant 1.000000e+00 : f32
    %184 = vector.broadcast %cst_43 : f32 to vector<2x32xf32>
    %185 = arith.subf %184, %178 : vector<2x32xf32>
    %186 = arith.mulf %185, %183 : vector<2x32xf32>
    %187 = arith.mulf %178, %151 : vector<2x32xf32>
    %188 = arith.addf %186, %187 : vector<2x32xf32>
    %189 = arith.index_cast %c4_i32 : i32 to index
    %c0_44 = arith.constant 0 : index
    %c0_45 = arith.constant 0 : index
    %190 = vector.load %arg5[%189, %c0_44, %c0_45] : memref<8x2x32xf32, #tpu.memory_space<vmem>>, vector<1x2x32xf32>
    %191 = vector.shape_cast %190 : vector<1x2x32xf32> to vector<2x32xf32>
    %192 = vector.shape_cast %188 : vector<2x32xf32> to vector<1x2x32xf32>
    tpu.vector_store %arg5[%189, %c0_44, %c0_45], %192 {strides = array<i32>} : memref<8x2x32xf32, #tpu.memory_space<vmem>>, vector<1x2x32xf32>,
    %c5_i32 = arith.constant 5 : i32
    %193 = arith.index_cast %c5_i32 : i32 to index
    %c0_46 = arith.constant 0 : index
    %c0_47 = arith.constant 0 : index
    %194 = vector.load %arg2[%193, %c0_46, %c0_47] : memref<8x2x96xbf16, #tpu.memory_space<vmem>>, vector<1x2x96xbf16>
    %195 = vector.shape_cast %194 : vector<1x2x96xbf16> to vector<2x96xbf16>
    %196 = arith.extf %195 : vector<2x96xbf16> to vector<2x96xf32>
    %197 = arith.truncf %188 : vector<2x32xf32> to vector<2x32xbf16>
    %cst_48 = arith.constant dense<0.000000e+00> : vector<2x96xf32>
    %198 = tpu.matmul %197, %3, %cst_48 {dimension_numbers = #tpu.dot_dimension_numbers<[1], [0], [0], [1], [0, 0, 1, 1], [], []>} : vector<2x32xbf16>, vector<32x96xbf16>, vector<2x96xf32> -> vector<2x96xf32>
    %199 = arith.addf %198, %6 : vector<2x96xf32>
    %200 = vector.extract_strided_slice %196 {offsets = [0, 0], sizes = [2, 32], strides = [1, 1]} : vector<2x96xf32> to vector<2x32xf32>
    %201 = vector.extract_strided_slice %199 {offsets = [0, 0], sizes = [2, 32], strides = [1, 1]} : vector<2x96xf32> to vector<2x32xf32>
    %202 = arith.addf %200, %201 : vector<2x32xf32>
    %203 = arith.negf %202 : vector<2x32xf32>
    %204 = math.exp %203 : vector<2x32xf32>
    %cst_49 = arith.constant 1.000000e+00 : f32
    %205 = vector.broadcast %cst_49 : f32 to vector<2x32xf32>
    %206 = arith.addf %205, %204 : vector<2x32xf32>
    %207 = arith.divf %205, %206 : vector<2x32xf32>
    %208 = vector.extract_strided_slice %196 {offsets = [0, 32], sizes = [2, 32], strides = [1, 1]} : vector<2x96xf32> to vector<2x32xf32>
    %209 = vector.extract_strided_slice %199 {offsets = [0, 32], sizes = [2, 32], strides = [1, 1]} : vector<2x96xf32> to vector<2x32xf32>
    %210 = arith.addf %208, %209 : vector<2x32xf32>
    %211 = arith.negf %210 : vector<2x32xf32>
    %212 = math.exp %211 : vector<2x32xf32>
    %cst_50 = arith.constant 1.000000e+00 : f32
    %213 = vector.broadcast %cst_50 : f32 to vector<2x32xf32>
    %214 = arith.addf %213, %212 : vector<2x32xf32>
    %215 = arith.divf %213, %214 : vector<2x32xf32>
    %216 = vector.extract_strided_slice %196 {offsets = [0, 64], sizes = [2, 32], strides = [1, 1]} : vector<2x96xf32> to vector<2x32xf32>
    %217 = vector.extract_strided_slice %199 {offsets = [0, 64], sizes = [2, 32], strides = [1, 1]} : vector<2x96xf32> to vector<2x32xf32>
    %218 = arith.mulf %207, %217 : vector<2x32xf32>
    %219 = arith.addf %216, %218 : vector<2x32xf32>
    %220 = math.tanh %219 : vector<2x32xf32>
    %cst_51 = arith.constant 1.000000e+00 : f32
    %221 = vector.broadcast %cst_51 : f32 to vector<2x32xf32>
    %222 = arith.subf %221, %215 : vector<2x32xf32>
    %223 = arith.mulf %222, %220 : vector<2x32xf32>
    %224 = arith.mulf %215, %188 : vector<2x32xf32>
    %225 = arith.addf %223, %224 : vector<2x32xf32>
    %226 = arith.index_cast %c5_i32 : i32 to index
    %c0_52 = arith.constant 0 : index
    %c0_53 = arith.constant 0 : index
    %227 = vector.load %arg5[%226, %c0_52, %c0_53] : memref<8x2x32xf32, #tpu.memory_space<vmem>>, vector<1x2x32xf32>
    %228 = vector.shape_cast %227 : vector<1x2x32xf32> to vector<2x32xf32>
    %229 = vector.shape_cast %225 : vector<2x32xf32> to vector<1x2x32xf32>
    tpu.vector_store %arg5[%226, %c0_52, %c0_53], %229 {strides = array<i32>} : memref<8x2x32xf32, #tpu.memory_space<vmem>>, vector<1x2x32xf32>,
    %c6_i32 = arith.constant 6 : i32
    %230 = arith.index_cast %c6_i32 : i32 to index
    %c0_54 = arith.constant 0 : index
    %c0_55 = arith.constant 0 : index
    %231 = vector.load %arg2[%230, %c0_54, %c0_55] : memref<8x2x96xbf16, #tpu.memory_space<vmem>>, vector<1x2x96xbf16>
    %232 = vector.shape_cast %231 : vector<1x2x96xbf16> to vector<2x96xbf16>
    %233 = arith.extf %232 : vector<2x96xbf16> to vector<2x96xf32>
    %234 = arith.truncf %225 : vector<2x32xf32> to vector<2x32xbf16>
    %cst_56 = arith.constant dense<0.000000e+00> : vector<2x96xf32>
    %235 = tpu.matmul %234, %3, %cst_56 {dimension_numbers = #tpu.dot_dimension_numbers<[1], [0], [0], [1], [0, 0, 1, 1], [], []>} : vector<2x32xbf16>, vector<32x96xbf16>, vector<2x96xf32> -> vector<2x96xf32>
    %236 = arith.addf %235, %6 : vector<2x96xf32>
    %237 = vector.extract_strided_slice %233 {offsets = [0, 0], sizes = [2, 32], strides = [1, 1]} : vector<2x96xf32> to vector<2x32xf32>
    %238 = vector.extract_strided_slice %236 {offsets = [0, 0], sizes = [2, 32], strides = [1, 1]} : vector<2x96xf32> to vector<2x32xf32>
    %239 = arith.addf %237, %238 : vector<2x32xf32>
    %240 = arith.negf %239 : vector<2x32xf32>
    %241 = math.exp %240 : vector<2x32xf32>
    %cst_57 = arith.constant 1.000000e+00 : f32
    %242 = vector.broadcast %cst_57 : f32 to vector<2x32xf32>
    %243 = arith.addf %242, %241 : vector<2x32xf32>
    %244 = arith.divf %242, %243 : vector<2x32xf32>
    %245 = vector.extract_strided_slice %233 {offsets = [0, 32], sizes = [2, 32], strides = [1, 1]} : vector<2x96xf32> to vector<2x32xf32>
    %246 = vector.extract_strided_slice %236 {offsets = [0, 32], sizes = [2, 32], strides = [1, 1]} : vector<2x96xf32> to vector<2x32xf32>
    %247 = arith.addf %245, %246 : vector<2x32xf32>
    %248 = arith.negf %247 : vector<2x32xf32>
    %249 = math.exp %248 : vector<2x32xf32>
    %cst_58 = arith.constant 1.000000e+00 : f32
    %250 = vector.broadcast %cst_58 : f32 to vector<2x32xf32>
    %251 = arith.addf %250, %249 : vector<2x32xf32>
    %252 = arith.divf %250, %251 : vector<2x32xf32>
    %253 = vector.extract_strided_slice %233 {offsets = [0, 64], sizes = [2, 32], strides = [1, 1]} : vector<2x96xf32> to vector<2x32xf32>
    %254 = vector.extract_strided_slice %236 {offsets = [0, 64], sizes = [2, 32], strides = [1, 1]} : vector<2x96xf32> to vector<2x32xf32>
    %255 = arith.mulf %244, %254 : vector<2x32xf32>
    %256 = arith.addf %253, %255 : vector<2x32xf32>
    %257 = math.tanh %256 : vector<2x32xf32>
    %cst_59 = arith.constant 1.000000e+00 : f32
    %258 = vector.broadcast %cst_59 : f32 to vector<2x32xf32>
    %259 = arith.subf %258, %252 : vector<2x32xf32>
    %260 = arith.mulf %259, %257 : vector<2x32xf32>
    %261 = arith.mulf %252, %225 : vector<2x32xf32>
    %262 = arith.addf %260, %261 : vector<2x32xf32>
    %263 = arith.index_cast %c6_i32 : i32 to index
    %c0_60 = arith.constant 0 : index
    %c0_61 = arith.constant 0 : index
    %264 = vector.load %arg5[%263, %c0_60, %c0_61] : memref<8x2x32xf32, #tpu.memory_space<vmem>>, vector<1x2x32xf32>
    %265 = vector.shape_cast %264 : vector<1x2x32xf32> to vector<2x32xf32>
    %266 = vector.shape_cast %262 : vector<2x32xf32> to vector<1x2x32xf32>
    tpu.vector_store %arg5[%263, %c0_60, %c0_61], %266 {strides = array<i32>} : memref<8x2x32xf32, #tpu.memory_space<vmem>>, vector<1x2x32xf32>,
    %c7_i32 = arith.constant 7 : i32
    %267 = arith.index_cast %c7_i32 : i32 to index
    %c0_62 = arith.constant 0 : index
    %c0_63 = arith.constant 0 : index
    %268 = vector.load %arg2[%267, %c0_62, %c0_63] : memref<8x2x96xbf16, #tpu.memory_space<vmem>>, vector<1x2x96xbf16>
    %269 = vector.shape_cast %268 : vector<1x2x96xbf16> to vector<2x96xbf16>
    %270 = arith.extf %269 : vector<2x96xbf16> to vector<2x96xf32>
    %271 = arith.truncf %262 : vector<2x32xf32> to vector<2x32xbf16>
    %cst_64 = arith.constant dense<0.000000e+00> : vector<2x96xf32>
    %272 = tpu.matmul %271, %3, %cst_64 {dimension_numbers = #tpu.dot_dimension_numbers<[1], [0], [0], [1], [0, 0, 1, 1], [], []>} : vector<2x32xbf16>, vector<32x96xbf16>, vector<2x96xf32> -> vector<2x96xf32>
    %273 = arith.addf %272, %6 : vector<2x96xf32>
    %274 = vector.extract_strided_slice %270 {offsets = [0, 0], sizes = [2, 32], strides = [1, 1]} : vector<2x96xf32> to vector<2x32xf32>
    %275 = vector.extract_strided_slice %273 {offsets = [0, 0], sizes = [2, 32], strides = [1, 1]} : vector<2x96xf32> to vector<2x32xf32>
    %276 = arith.addf %274, %275 : vector<2x32xf32>
    %277 = arith.negf %276 : vector<2x32xf32>
    %278 = math.exp %277 : vector<2x32xf32>
    %cst_65 = arith.constant 1.000000e+00 : f32
    %279 = vector.broadcast %cst_65 : f32 to vector<2x32xf32>
    %280 = arith.addf %279, %278 : vector<2x32xf32>
    %281 = arith.divf %279, %280 : vector<2x32xf32>
    %282 = vector.extract_strided_slice %270 {offsets = [0, 32], sizes = [2, 32], strides = [1, 1]} : vector<2x96xf32> to vector<2x32xf32>
    %283 = vector.extract_strided_slice %273 {offsets = [0, 32], sizes = [2, 32], strides = [1, 1]} : vector<2x96xf32> to vector<2x32xf32>
    %284 = arith.addf %282, %283 : vector<2x32xf32>
    %285 = arith.negf %284 : vector<2x32xf32>
    %286 = math.exp %285 : vector<2x32xf32>
    %cst_66 = arith.constant 1.000000e+00 : f32
    %287 = vector.broadcast %cst_66 : f32 to vector<2x32xf32>
    %288 = arith.addf %287, %286 : vector<2x32xf32>
    %289 = arith.divf %287, %288 : vector<2x32xf32>
    %290 = vector.extract_strided_slice %270 {offsets = [0, 64], sizes = [2, 32], strides = [1, 1]} : vector<2x96xf32> to vector<2x32xf32>
    %291 = vector.extract_strided_slice %273 {offsets = [0, 64], sizes = [2, 32], strides = [1, 1]} : vector<2x96xf32> to vector<2x32xf32>
    %292 = arith.mulf %281, %291 : vector<2x32xf32>
    %293 = arith.addf %290, %292 : vector<2x32xf32>
    %294 = math.tanh %293 : vector<2x32xf32>
    %cst_67 = arith.constant 1.000000e+00 : f32
    %295 = vector.broadcast %cst_67 : f32 to vector<2x32xf32>
    %296 = arith.subf %295, %289 : vector<2x32xf32>
    %297 = arith.mulf %296, %294 : vector<2x32xf32>
    %298 = arith.mulf %289, %262 : vector<2x32xf32>
    %299 = arith.addf %297, %298 : vector<2x32xf32>
    %300 = arith.index_cast %c7_i32 : i32 to index
    %c0_68 = arith.constant 0 : index
    %c0_69 = arith.constant 0 : index
    %301 = vector.load %arg5[%300, %c0_68, %c0_69] : memref<8x2x32xf32, #tpu.memory_space<vmem>>, vector<1x2x32xf32>
    %302 = vector.shape_cast %301 : vector<1x2x32xf32> to vector<2x32xf32>
    %303 = vector.shape_cast %299 : vector<2x32xf32> to vector<1x2x32xf32>
    tpu.vector_store %arg5[%300, %c0_68, %c0_69], %303 {strides = array<i32>} : memref<8x2x32xf32, #tpu.memory_space<vmem>>, vector<1x2x32xf32>,
    %c8_i32 = arith.constant 8 : i32
    %c0_70 = arith.constant 0 : index
    %c0_71 = arith.constant 0 : index
    %304 = vector.load %arg6[%c0_70, %c0_71] : memref<2x32xf32, #tpu.memory_space<vmem>>, vector<2x32xf32>
    tpu.vector_store %arg6[%c0_70, %c0_71], %299 {strides = array<i32>} : memref<2x32xf32, #tpu.memory_space<vmem>>, vector<2x32xf32>,
    return
  }
  func.func @transform_0(%arg0: i32, %arg1: i32) -> (i32, i32, i32) {
    %c0_i32 = arith.constant 0 : i32
    %c0_i32_0 = arith.constant 0 : i32
    return %arg1, %arg0, %c0_i32 : i32, i32, i32
  }
  func.func @transform_1(%arg0: i32, %arg1: i32) -> (i32, i32) {
    %c0_i32 = arith.constant 0 : i32
    %c0_i32_0 = arith.constant 0 : i32
    %c0_i32_1 = arith.constant 0 : i32
    return %c0_i32, %c0_i32_0 : i32, i32
  }
  func.func @transform_2(%arg0: i32, %arg1: i32) -> (i32, i32) {
    %c0_i32 = arith.constant 0 : i32
    %c0_i32_0 = arith.constant 0 : i32
    %c0_i32_1 = arith.constant 0 : i32
    return %c0_i32, %c0_i32_0 : i32, i32
  }
  func.func @transform_3(%arg0: i32, %arg1: i32) -> (i32, i32, i32) {
    %c0_i32 = arith.constant 0 : i32
    %c0_i32_0 = arith.constant 0 : i32
    return %arg1, %arg0, %c0_i32 : i32, i32, i32
  }
}

</mosaic_0001>

<llo_original>
// kernel: tpu_custom_call.1
$region0: #{tpu_custom_call.1}
  #allocation0 [shape = 'u32[]', space=smem, size = 0x4, offset = 0x4, fixed_abs, tag = 'smem constant byte address 0x4 - core index']
  #allocation1 [shape = 'u32[144,128]{1,0:T(1,128)}', space=vmem, size = 0x12000, scoped, tag = 'internal scratch']
  #allocation2 [shape = 'f32[2,32]{1,0:T(2,128)}', space=vmem, size = 0x400, scoped, tag = 'scratch operand']
  %s0 = inlined_call_operand.hbm [shape: bf16[8,2,96], index: 0, kind: input, shape index: {}]
  %s1 = inlined_call_operand.hbm [shape: bf16[32,96], index: 1, kind: input, shape index: {}]
  %s2 = inlined_call_operand.vmem [shape: f32[1,96], index: 2, kind: input, shape index: {}]
  %s3 = inlined_call_operand.hbm [shape: f32[8,2,32], index: 3, kind: output, shape index: {}]
  %s4 = sld [smem:[#allocation0]]
  $region34: #{tpu_custom_call.1} parent=0
    _
  %s6 = ssub.s32 1, %s4
  %s7 = scalar_select 0, %s6, %s4
  $region1: #{tpu_custom_call.1} parent=0
    #allocation3 [shape = 'u8[4096]{0}', space=vmem, size = 0x1000, scoped, tag = 'input window, operand 0, single buffered']
    #allocation4 [shape = 's32[1]{0}', space=sflag, size = 0x4, scoped, tag = 'scoped memory for tpu_custom_call.1']
    #allocation5 [shape = 's32[1]{0}', space=sflag, size = 0x4, scoped, tag = 'scoped memory for tpu_custom_call.1']
    #allocation6 [shape = 'u8[8192]{0}', space=vmem, size = 0x2000, scoped, tag = 'input window, operand 1, single buffered']
    #allocation7 [shape = 's32[1]{0}', space=sflag, size = 0x4, scoped, tag = 'scoped memory for tpu_custom_call.1']
    #allocation8 [shape = 'u8[8192]{0}', space=vmem, size = 0x2000, scoped, tag = 'output window, operand 0, single buffered']
    %8 = vsyncpa [#allocation4], 0
    %9 = vsyncpa [#allocation7], 0
    %10 = vsyncpa [#allocation5], 0
    // Predicated region
    $region2: #{tpu_custom_call.1} parent=1 // pred_check
      _
    $region3: #{tpu_custom_call.1} parent=1 // pred_check_branch
      %12 = sbr.rel (0) target = $region5
    $region4: #{tpu_custom_call.1} parent=1 // pred_region
      %s14 = ssub.s32 128, 128
      %15 = vsyncadd [#allocation4], %s14
      %s16 = sshll.u32 [#allocation3], 4
      %s17 = int_to_ptr.vmem [resolvable:$true] %s16
      %22 = dma.hbm_to_vmem [thread:$0]  %s0, 128, %s17, [#allocation4], 16, 16, 1
    $region5: #{tpu_custom_call.1} parent=1 // pred_fallthru
      _
    // Predicated region
    $region6: #{tpu_custom_call.1} parent=1 // pred_check
      _
    $region7: #{tpu_custom_call.1} parent=1 // pred_check_branch
      %24 = sbr.rel (0) target = $region9
    $region8: #{tpu_custom_call.1} parent=1 // pred_region
      %s26 = ssub.s32 256, 256
      %27 = vsyncadd [#allocation7], %s26
      %s28 = sshll.u32 [#allocation6], 4
      %s29 = int_to_ptr.vmem [resolvable:$true] %s28
      %34 = dma.hbm_to_vmem [thread:$0]  %s1, 256, %s29, [#allocation7], 64, 64, 4
    $region9: #{tpu_custom_call.1} parent=1 // pred_fallthru
      _
    // Predicated region
    $region10: #{tpu_custom_call.1} parent=1 // pred_check
      _
    $region11: #{tpu_custom_call.1} parent=1 // pred_check_branch
      %36 = sbr.rel (0) target = $region13
    $region12: #{tpu_custom_call.1} parent=1 // pred_region
      _
    $region13: #{tpu_custom_call.1} parent=1 // pred_fallthru
      _
    // Predicated region
    $region14: #{tpu_custom_call.1} parent=1 // pred_check
      _
    $region15: #{tpu_custom_call.1} parent=1 // pred_check_branch
      %38 = sbr.rel (0) target = $region17
    $region16: #{tpu_custom_call.1} parent=1 // pred_region
      %39 = dma.done [#allocation4], 128
    $region17: #{tpu_custom_call.1} parent=1 // pred_fallthru
      _
    // Predicated region
    $region18: #{tpu_custom_call.1} parent=1 // pred_check
      _
    $region19: #{tpu_custom_call.1} parent=1 // pred_check_branch
      %41 = sbr.rel (0) target = $region21
    $region20: #{tpu_custom_call.1} parent=1 // pred_region
      %42 = dma.done [#allocation7], 256
    $region21: #{tpu_custom_call.1} parent=1 // pred_fallthru
      _
    %p44 = scmp.eq.s32.totalorder 0, 0
    // Predicated region
    $region22: #{tpu_custom_call.1} parent=1 // pred_check
      %p45 = pneg %p44
    $region23: #{tpu_custom_call.1} parent=1 // pred_check_branch
      %47 = sbr.rel (%p45) target = $region25
    $region24: #{tpu_custom_call.1} parent=1 // pred_region
      %vm48 = vcmask 254976
      %49 = vst.msk [vmem:[#allocation2] sm:$0x3] %vm48, 0.0
    $region25: #{tpu_custom_call.1} parent=1 // pred_fallthru
      _
    %v50 = vld [vmem:[#allocation6] sm:$0xf]
    %v51 = vld [vmem:[#allocation6 + $0x4] sm:$0xf]
    %v52 = vld [vmem:[#allocation6 + $0x8] sm:$0xf]
    %v53 = vld [vmem:[#allocation6 + $0xc] sm:$0xf]
    %v54 = vld [vmem:[%s2] sm:$0x1]
    %v56 = vlaneseq
    %v57 = vshrl.u32 %v56, 7
    %v58 = vsub.s32 0, %v57
    %v59 = vrot.slane %v54, %v58
    %v61 = vld [vmem:[#allocation2] sm:$0x3]
    %v62 = vld [vmem:[#allocation3] sm:$0x1]
    %v63 = vunpack.c.l.bf16 %v62
    %v64 = vpack.c.bf16 %v61, %v61
    %v69 = vunpack.c.l.b16 %v50
    %v70 = vunpack.c.l.b16 %v51
    %v71 = vunpack.c.l.b16 %v52
    %v72 = vunpack.c.l.b16 %v53
    %v73 = vpack.c.b16 %v70, %v69
    %v74 = vpack.c.b16 %v72, %v71
    %vm77 = vcmask 261120
    %v79 = vsel %vm77, %v64, 0
    %81 = vmatprep.subr.bf16.mxu0 0
    %82 = vmatpush1.bf16.msra.mxu0 %v73
    %83 = vmatprep.subr.bf16.mxu0 0
    %84 = vmatpush1.bf16.msra.mxu0 %v74
    %85 = vmatprep.subr.bf16.mxu0 0
    %86 = vmatpush1.bf16.msra.mxu0 0
    %87 = vmatprep.subr.bf16.mxu0 0
    %88 = vmatpush1.bf16.msra.mxu0 0
    %89 = vmatprep.subr.bf16.mxu0 0
    %90 = vmatpush1.bf16.msra.mxu0 0
    %91 = vmatprep.subr.bf16.mxu0 0
    %92 = vmatpush1.bf16.msra.mxu0 0
    %93 = vmatprep.subr.bf16.mxu0 0
    %94 = vmatpush1.bf16.msra.mxu0 0
    %95 = vmatprep.subr.bf16.mxu0 0
    %96 = vmatpush1.bf16.msra.mxu0 0
    %97 = vmatprep.subr.bf16.mxu0 0
    %98 = vmatpush1.bf16.msra.mxu0 0
    %99 = vmatprep.subr.bf16.mxu0 0
    %100 = vmatpush1.bf16.msra.mxu0 0
    %101 = vmatprep.subr.bf16.mxu0 0
    %102 = vmatpush1.bf16.msra.mxu0 0
    %103 = vmatprep.subr.bf16.mxu0 0
    %104 = vmatpush1.bf16.msra.mxu0 0
    %105 = vmatprep.subr.bf16.mxu0 0
    %106 = vmatpush1.bf16.msra.mxu0 0
    %107 = vmatprep.subr.bf16.mxu0 0
    %108 = vmatpush1.bf16.msra.mxu0 0
    %109 = vmatprep.subr.bf16.mxu0 0
    %110 = vmatpush1.bf16.msra.mxu0 0
    %111 = vmatprep.subr.bf16.mxu0 0
    %112 = vmatpush1.bf16.msra.mxu0 0
    %113 = vmatprep.mubr.bf16.mxu0 0
    %114 = vmatmul.mubr.bf16.gmra.mrb[0].mxu0 %v79
    %v115 = vpop.f32.mrb[0].mxu0
    %v116 = vadd.f32 %v59, %v115
    %v117 = vpop.f32.mrb[0].mxu0
    %v118 = vpop.f32.mrb[0].mxu0
    %v119 = vpop.f32.mrb[0].mxu0
    %120 = vdwg.mxu0
    %v121 = vadd.f32 %v63, %v116
    %v122 = vxor.u32 %v121, 2147483648
    %v123 = vmul.f32 %v122, 1.442695
    %v124 = vpow.pop %v123
    %v125 = vadd.f32 %v124, 1.0
    %v126 = vrcp.pop %v125
    %v127 = vmul.f32 1.0, %v126
    %v130 = vunpack.c.l.s4 1983009808
    %v131 = vunpack.c.0.s8 %v130
    %v132 = vlaneseq
    %v133 = vshrl.u32 %v132, 7
    %v134 = vsub.s32 %v131, %v133
    %v135 = vrot.slane %v116, %v134
    %136 = vrot.lane.b32.xlu0 %v135, 64
    %v137 = vpop.permute.xlu0 %136
    %v139 = vmul.f32 %v127, %v137
    %141 = vrot.lane.b32.xlu0 %v139, 64
    %v142 = vpop.permute.xlu0 %141
    %v144 = vadd.f32 %v63, %v142
    %v145 = vtanh.pop %v144
    %v146 = vsub.f32 1.0, %v127
    %148 = vrot.lane.b32.xlu0 %v145, 96
    %v149 = vpop.permute.xlu0 %148
    %v151 = vmul.f32 %v146, %v149
    %v154 = vunpack.c.l.s4 1983009808
    %v155 = vunpack.c.0.s8 %v154
    %v156 = vlaneseq
    %v157 = vshrl.u32 %v156, 7
    %v158 = vsub.s32 %v155, %v157
    %v159 = vrot.slane %v61, %v158
    %160 = vrot.lane.b32.xlu0 %v159, 32
    %v161 = vpop.permute.xlu0 %160
    %v163 = vmul.f32 %v127, %v161
    %v164 = vadd.f32 %v151, %v163
    %v167 = vunpack.c.l.s4 1983009808
    %v168 = vunpack.c.0.s8 %v167
    %v169 = vlaneseq
    %v170 = vshrl.u32 %v169, 7
    %v171 = vsub.s32 %v168, %v170
    %v172 = vrot.slane %v164, %v171
    %173 = vrot.lane.b32.xlu0 %v172, 96
    %v174 = vpop.permute.xlu0 %173
    %vm176 = vcmask 254976
    %177 = vst.msk [vmem:[#allocation8] sm:$0x3] %vm176, %v174
    %s178 = scalar_lea.vmem [#allocation3], 1
    %v179 = vld [vmem:[%s178] sm:$0x1]
    %v180 = vunpack.c.l.bf16 %v179
    %v181 = vpack.c.bf16 %v164, %v164
    %183 = vrot.lane.b32.xlu0 %v181, 96
    %v184 = vpop.permute.xlu0 %183
    %v186 = vsel %vm77, %v184, 0
    %188 = vmatprep.subr.bf16.mxu0 0
    %189 = vmatpush1.bf16.msra.mxu0 %v73
    %190 = vmatprep.subr.bf16.mxu0 0
    %191 = vmatpush1.bf16.msra.mxu0 %v74
    %192 = vmatprep.subr.bf16.mxu0 0
    %193 = vmatpush1.bf16.msra.mxu0 0
    %194 = vmatprep.subr.bf16.mxu0 0
    %195 = vmatpush1.bf16.msra.mxu0 0
    %196 = vmatprep.subr.bf16.mxu0 0
    %197 = vmatpush1.bf16.msra.mxu0 0
    %198 = vmatprep.subr.bf16.mxu0 0
    %199 = vmatpush1.bf16.msra.mxu0 0
    %200 = vmatprep.subr.bf16.mxu0 0
    %201 = vmatpush1.bf16.msra.mxu0 0
    %202 = vmatprep.subr.bf16.mxu0 0
    %203 = vmatpush1.bf16.msra.mxu0 0
    %204 = vmatprep.subr.bf16.mxu0 0
    %205 = vmatpush1.bf16.msra.mxu0 0
    %206 = vmatprep.subr.bf16.mxu0 0
    %207 = vmatpush1.bf16.msra.mxu0 0
    %208 = vmatprep.subr.bf16.mxu0 0
    %209 = vmatpush1.bf16.msra.mxu0 0
    %210 = vmatprep.subr.bf16.mxu0 0
    %211 = vmatpush1.bf16.msra.mxu0 0
    %212 = vmatprep.subr.bf16.mxu0 0
    %213 = vmatpush1.bf16.msra.mxu0 0
    %214 = vmatprep.subr.bf16.mxu0 0
    %215 = vmatpush1.bf16.msra.mxu0 0
    %216 = vmatprep.subr.bf16.mxu0 0
    %217 = vmatpush1.bf16.msra.mxu0 0
    %218 = vmatprep.subr.bf16.mxu0 0
    %219 = vmatpush1.bf16.msra.mxu0 0
    %220 = vmatprep.mubr.bf16.mxu0 0
    %221 = vmatmul.mubr.bf16.gmra.mrb[0].mxu0 %v186
    %v222 = vpop.f32.mrb[0].mxu0
    %v223 = vadd.f32 %v59, %v222
    %v224 = vpop.f32.mrb[0].mxu0
    %v225 = vpop.f32.mrb[0].mxu0
    %v226 = vpop.f32.mrb[0].mxu0
    %227 = vdwg.mxu0
    %v228 = vadd.f32 %v180, %v223
    %v229 = vxor.u32 %v228, 2147483648
    %v230 = vmul.f32 %v229, 1.442695
    %v231 = vpow.pop %v230
    %v232 = vadd.f32 %v231, 1.0
    %v233 = vrcp.pop %v232
    %v234 = vmul.f32 1.0, %v233
    %v237 = vunpack.c.l.s4 1983009808
    %v238 = vunpack.c.0.s8 %v237
    %v239 = vlaneseq
    %v240 = vshrl.u32 %v239, 7
    %v241 = vsub.s32 %v238, %v240
    %v242 = vrot.slane %v223, %v241
    %243 = vrot.lane.b32.xlu0 %v242, 64
    %v244 = vpop.permute.xlu0 %243
    %v246 = vmul.f32 %v234, %v244
    %248 = vrot.lane.b32.xlu0 %v246, 64
    %v249 = vpop.permute.xlu0 %248
    %v251 = vadd.f32 %v180, %v249
    %v252 = vtanh.pop %v251
    %v253 = vsub.f32 1.0, %v234
    %255 = vrot.lane.b32.xlu0 %v252, 96
    %v256 = vpop.permute.xlu0 %255
    %v258 = vmul.f32 %v253, %v256
    %v259 = vmul.f32 %v234, %v164
    %v260 = vadd.f32 %v258, %v259
    %v263 = vunpack.c.l.s4 1983009808
    %v264 = vunpack.c.0.s8 %v263
    %v265 = vlaneseq
    %v266 = vshrl.u32 %v265, 7
    %v267 = vsub.s32 %v264, %v266
    %v268 = vrot.slane %v260, %v267
    %269 = vrot.lane.b32.xlu0 %v268, 96
    %v270 = vpop.permute.xlu0 %269
    %s272 = scalar_lea.vmem [#allocation8], 2
    %273 = vst.msk [vmem:[%s272] sm:$0x3] %vm176, %v270
    %s274 = scalar_lea.vmem [#allocation3], 2
    %v275 = vld [vmem:[%s274] sm:$0x1]
    %v276 = vunpack.c.l.bf16 %v275
    %v277 = vpack.c.bf16 %v260, %v260
    %279 = vrot.lane.b32.xlu0 %v277, 96
    %v280 = vpop.permute.xlu0 %279
    %v282 = vsel %vm77, %v280, 0
    %284 = vmatprep.subr.bf16.mxu0 0
    %285 = vmatpush1.bf16.msra.mxu0 %v73
    %286 = vmatprep.subr.bf16.mxu0 0
    %287 = vmatpush1.bf16.msra.mxu0 %v74
    %288 = vmatprep.subr.bf16.mxu0 0
    %289 = vmatpush1.bf16.msra.mxu0 0
    %290 = vmatprep.subr.bf16.mxu0 0
    %291 = vmatpush1.bf16.msra.mxu0 0
    %292 = vmatprep.subr.bf16.mxu0 0
    %293 = vmatpush1.bf16.msra.mxu0 0
    %294 = vmatprep.subr.bf16.mxu0 0
    %295 = vmatpush1.bf16.msra.mxu0 0
    %296 = vmatprep.subr.bf16.mxu0 0
    %297 = vmatpush1.bf16.msra.mxu0 0
    %298 = vmatprep.subr.bf16.mxu0 0
    %299 = vmatpush1.bf16.msra.mxu0 0
    %300 = vmatprep.subr.bf16.mxu0 0
    %301 = vmatpush1.bf16.msra.mxu0 0
    %302 = vmatprep.subr.bf16.mxu0 0
    %303 = vmatpush1.bf16.msra.mxu0 0
    %304 = vmatprep.subr.bf16.mxu0 0
    %305 = vmatpush1.bf16.msra.mxu0 0
    %306 = vmatprep.subr.bf16.mxu0 0
    %307 = vmatpush1.bf16.msra.mxu0 0
    %308 = vmatprep.subr.bf16.mxu0 0
    %309 = vmatpush1.bf16.msra.mxu0 0
    %310 = vmatprep.subr.bf16.mxu0 0
    %311 = vmatpush1.bf16.msra.mxu0 0
    %312 = vmatprep.subr.bf16.mxu0 0
    %313 = vmatpush1.bf16.msra.mxu0 0
    %314 = vmatprep.subr.bf16.mxu0 0
    %315 = vmatpush1.bf16.msra.mxu0 0
    %316 = vmatprep.mubr.bf16.mxu0 0
    %317 = vmatmul.mubr.bf16.gmra.mrb[0].mxu0 %v282
    %v318 = vpop.f32.mrb[0].mxu0
    %v319 = vadd.f32 %v59, %v318
    %v320 = vpop.f32.mrb[0].mxu0
    %v321 = vpop.f32.mrb[0].mxu0
    %v322 = vpop.f32.mrb[0].mxu0
    %323 = vdwg.mxu0
    %v324 = vadd.f32 %v276, %v319
    %v325 = vxor.u32 %v324, 2147483648
    %v326 = vmul.f32 %v325, 1.442695
    %v327 = vpow.pop %v326
    %v328 = vadd.f32 %v327, 1.0
    %v329 = vrcp.pop %v328
    %v330 = vmul.f32 1.0, %v329
    %v333 = vunpack.c.l.s4 1983009808
    %v334 = vunpack.c.0.s8 %v333
    %v335 = vlaneseq
    %v336 = vshrl.u32 %v335, 7
    %v337 = vsub.s32 %v334, %v336
    %v338 = vrot.slane %v319, %v337
    %339 = vrot.lane.b32.xlu0 %v338, 64
    %v340 = vpop.permute.xlu0 %339
    %v342 = vmul.f32 %v330, %v340
    %344 = vrot.lane.b32.xlu0 %v342, 64
    %v345 = vpop.permute.xlu0 %344
    %v347 = vadd.f32 %v276, %v345
    %v348 = vtanh.pop %v347
    %v349 = vsub.f32 1.0, %v330
    %351 = vrot.lane.b32.xlu0 %v348, 96
    %v352 = vpop.permute.xlu0 %351
    %v354 = vmul.f32 %v349, %v352
    %v355 = vmul.f32 %v330, %v260
    %v356 = vadd.f32 %v354, %v355
    %v359 = vunpack.c.l.s4 1983009808
    %v360 = vunpack.c.0.s8 %v359
    %v361 = vlaneseq
    %v362 = vshrl.u32 %v361, 7
    %v363 = vsub.s32 %v360, %v362
    %v364 = vrot.slane %v356, %v363
    %365 = vrot.lane.b32.xlu0 %v364, 96
    %v366 = vpop.permute.xlu0 %365
    %s368 = scalar_lea.vmem [#allocation8], 4
    %369 = vst.msk [vmem:[%s368] sm:$0x3] %vm176, %v366
    %s370 = scalar_lea.vmem [#allocation3], 3
    %v371 = vld [vmem:[%s370] sm:$0x1]
    %v372 = vunpack.c.l.bf16 %v371
    %v373 = vpack.c.bf16 %v356, %v356
    %375 = vrot.lane.b32.xlu0 %v373, 96
    %v376 = vpop.permute.xlu0 %375
    %v378 = vsel %vm77, %v376, 0
    %380 = vmatprep.subr.bf16.mxu0 0
    %381 = vmatpush1.bf16.msra.mxu0 %v73
    %382 = vmatprep.subr.bf16.mxu0 0
    %383 = vmatpush1.bf16.msra.mxu0 %v74
    %384 = vmatprep.subr.bf16.mxu0 0
    %385 = vmatpush1.bf16.msra.mxu0 0
    %386 = vmatprep.subr.bf16.mxu0 0
    %387 = vmatpush1.bf16.msra.mxu0 0
    %388 = vmatprep.subr.bf16.mxu0 0
    %389 = vmatpush1.bf16.msra.mxu0 0
    %390 = vmatprep.subr.bf16.mxu0 0
    %391 = vmatpush1.bf16.msra.mxu0 0
    %392 = vmatprep.subr.bf16.mxu0 0
    %393 = vmatpush1.bf16.msra.mxu0 0
    %394 = vmatprep.subr.bf16.mxu0 0
    %395 = vmatpush1.bf16.msra.mxu0 0
    %396 = vmatprep.subr.bf16.mxu0 0
    %397 = vmatpush1.bf16.msra.mxu0 0
    %398 = vmatprep.subr.bf16.mxu0 0
    %399 = vmatpush1.bf16.msra.mxu0 0
    %400 = vmatprep.subr.bf16.mxu0 0
    %401 = vmatpush1.bf16.msra.mxu0 0
    %402 = vmatprep.subr.bf16.mxu0 0
    %403 = vmatpush1.bf16.msra.mxu0 0
    %404 = vmatprep.subr.bf16.mxu0 0
    %405 = vmatpush1.bf16.msra.mxu0 0
    %406 = vmatprep.subr.bf16.mxu0 0
    %407 = vmatpush1.bf16.msra.mxu0 0
    %408 = vmatprep.subr.bf16.mxu0 0
    %409 = vmatpush1.bf16.msra.mxu0 0
    %410 = vmatprep.subr.bf16.mxu0 0
    %411 = vmatpush1.bf16.msra.mxu0 0
    %412 = vmatprep.mubr.bf16.mxu0 0
    %413 = vmatmul.mubr.bf16.gmra.mrb[0].mxu0 %v378
    %v414 = vpop.f32.mrb[0].mxu0
    %v415 = vadd.f32 %v59, %v414
    %v416 = vpop.f32.mrb[0].mxu0
    %v417 = vpop.f32.mrb[0].mxu0
    %v418 = vpop.f32.mrb[0].mxu0
    %419 = vdwg.mxu0
    %v420 = vadd.f32 %v372, %v415
    %v421 = vxor.u32 %v420, 2147483648
    %v422 = vmul.f32 %v421, 1.442695
    %v423 = vpow.pop %v422
    %v424 = vadd.f32 %v423, 1.0
    %v425 = vrcp.pop %v424
    %v426 = vmul.f32 1.0, %v425
    %v429 = vunpack.c.l.s4 1983009808
    %v430 = vunpack.c.0.s8 %v429
    %v431 = vlaneseq
    %v432 = vshrl.u32 %v431, 7
    %v433 = vsub.s32 %v430, %v432
    %v434 = vrot.slane %v415, %v433
    %435 = vrot.lane.b32.xlu0 %v434, 64
    %v436 = vpop.permute.xlu0 %435
    %v438 = vmul.f32 %v426, %v436
    %440 = vrot.lane.b32.xlu0 %v438, 64
    %v441 = vpop.permute.xlu0 %440
    %v443 = vadd.f32 %v372, %v441
    %v444 = vtanh.pop %v443
    %v445 = vsub.f32 1.0, %v426
    %447 = vrot.lane.b32.xlu0 %v444, 96
    %v448 = vpop.permute.xlu0 %447
    %v450 = vmul.f32 %v445, %v448
    %v451 = vmul.f32 %v426, %v356
    %v452 = vadd.f32 %v450, %v451
    %v455 = vunpack.c.l.s4 1983009808
    %v456 = vunpack.c.0.s8 %v455
    %v457 = vlaneseq
    %v458 = vshrl.u32 %v457, 7
    %v459 = vsub.s32 %v456, %v458
    %v460 = vrot.slane %v452, %v459
    %461 = vrot.lane.b32.xlu0 %v460, 96
    %v462 = vpop.permute.xlu0 %461
    %s464 = scalar_lea.vmem [#allocation8], 6
    %465 = vst.msk [vmem:[%s464] sm:$0x3] %vm176, %v462
    %s466 = scalar_lea.vmem [#allocation3], 4
    %v467 = vld [vmem:[%s466] sm:$0x1]
    %v468 = vunpack.c.l.bf16 %v467
    %v469 = vpack.c.bf16 %v452, %v452
    %471 = vrot.lane.b32.xlu0 %v469, 96
    %v472 = vpop.permute.xlu0 %471
    %v474 = vsel %vm77, %v472, 0
    %476 = vmatprep.subr.bf16.mxu0 0
    %477 = vmatpush1.bf16.msra.mxu0 %v73
    %478 = vmatprep.subr.bf16.mxu0 0
    %479 = vmatpush1.bf16.msra.mxu0 %v74
    %480 = vmatprep.subr.bf16.mxu0 0
    %481 = vmatpush1.bf16.msra.mxu0 0
    %482 = vmatprep.subr.bf16.mxu0 0
    %483 = vmatpush1.bf16.msra.mxu0 0
    %484 = vmatprep.subr.bf16.mxu0 0
    %485 = vmatpush1.bf16.msra.mxu0 0
    %486 = vmatprep.subr.bf16.mxu0 0
    %487 = vmatpush1.bf16.msra.mxu0 0
    %488 = vmatprep.subr.bf16.mxu0 0
    %489 = vmatpush1.bf16.msra.mxu0 0
    %490 = vmatprep.subr.bf16.mxu0 0
    %491 = vmatpush1.bf16.msra.mxu0 0
    %492 = vmatprep.subr.bf16.mxu0 0
    %493 = vmatpush1.bf16.msra.mxu0 0
    %494 = vmatprep.subr.bf16.mxu0 0
    %495 = vmatpush1.bf16.msra.mxu0 0
    %496 = vmatprep.subr.bf16.mxu0 0
    %497 = vmatpush1.bf16.msra.mxu0 0
    %498 = vmatprep.subr.bf16.mxu0 0
    %499 = vmatpush1.bf16.msra.mxu0 0
    %500 = vmatprep.subr.bf16.mxu0 0
    %501 = vmatpush1.bf16.msra.mxu0 0
    %502 = vmatprep.subr.bf16.mxu0 0
    %503 = vmatpush1.bf16.msra.mxu0 0
    %504 = vmatprep.subr.bf16.mxu0 0
    %505 = vmatpush1.bf16.msra.mxu0 0
    %506 = vmatprep.subr.bf16.mxu0 0
    %507 = vmatpush1.bf16.msra.mxu0 0
    %508 = vmatprep.mubr.bf16.mxu0 0
    %509 = vmatmul.mubr.bf16.gmra.mrb[0].mxu0 %v474
    %v510 = vpop.f32.mrb[0].mxu0
    %v511 = vadd.f32 %v59, %v510
    %v512 = vpop.f32.mrb[0].mxu0
    %v513 = vpop.f32.mrb[0].mxu0
    %v514 = vpop.f32.mrb[0].mxu0
    %515 = vdwg.mxu0
    %v516 = vadd.f32 %v468, %v511
    %v517 = vxor.u32 %v516, 2147483648
    %v518 = vmul.f32 %v517, 1.442695
    %v519 = vpow.pop %v518
    %v520 = vadd.f32 %v519, 1.0
    %v521 = vrcp.pop %v520
    %v522 = vmul.f32 1.0, %v521
    %v525 = vunpack.c.l.s4 1983009808
    %v526 = vunpack.c.0.s8 %v525
    %v527 = vlaneseq
    %v528 = vshrl.u32 %v527, 7
    %v529 = vsub.s32 %v526, %v528
    %v530 = vrot.slane %v511, %v529
    %531 = vrot.lane.b32.xlu0 %v530, 64
    %v532 = vpop.permute.xlu0 %531
    %v534 = vmul.f32 %v522, %v532
    %536 = vrot.lane.b32.xlu0 %v534, 64
    %v537 = vpop.permute.xlu0 %536
    %v539 = vadd.f32 %v468, %v537
    %v540 = vtanh.pop %v539
    %v541 = vsub.f32 1.0, %v522
    %543 = vrot.lane.b32.xlu0 %v540, 96
    %v544 = vpop.permute.xlu0 %543
    %v546 = vmul.f32 %v541, %v544
    %v547 = vmul.f32 %v522, %v452
    %v548 = vadd.f32 %v546, %v547
    %v551 = vunpack.c.l.s4 1983009808
    %v552 = vunpack.c.0.s8 %v551
    %v553 = vlaneseq
    %v554 = vshrl.u32 %v553, 7
    %v555 = vsub.s32 %v552, %v554
    %v556 = vrot.slane %v548, %v555
    %557 = vrot.lane.b32.xlu0 %v556, 96
    %v558 = vpop.permute.xlu0 %557
    %s560 = scalar_lea.vmem [#allocation8], 8
    %561 = vst.msk [vmem:[%s560] sm:$0x3] %vm176, %v558
    %s562 = scalar_lea.vmem [#allocation3], 5
    %v563 = vld [vmem:[%s562] sm:$0x1]
    %v564 = vunpack.c.l.bf16 %v563
    %v565 = vpack.c.bf16 %v548, %v548
    %567 = vrot.lane.b32.xlu0 %v565, 96
    %v568 = vpop.permute.xlu0 %567
    %v570 = vsel %vm77, %v568, 0
    %572 = vmatprep.subr.bf16.mxu0 0
    %573 = vmatpush1.bf16.msra.mxu0 %v73
    %574 = vmatprep.subr.bf16.mxu0 0
    %575 = vmatpush1.bf16.msra.mxu0 %v74
    %576 = vmatprep.subr.bf16.mxu0 0
    %577 = vmatpush1.bf16.msra.mxu0 0
    %578 = vmatprep.subr.bf16.mxu0 0
    %579 = vmatpush1.bf16.msra.mxu0 0
    %580 = vmatprep.subr.bf16.mxu0 0
    %581 = vmatpush1.bf16.msra.mxu0 0
    %582 = vmatprep.subr.bf16.mxu0 0
    %583 = vmatpush1.bf16.msra.mxu0 0
    %584 = vmatprep.subr.bf16.mxu0 0
    %585 = vmatpush1.bf16.msra.mxu0 0
    %586 = vmatprep.subr.bf16.mxu0 0
    %587 = vmatpush1.bf16.msra.mxu0 0
    %588 = vmatprep.subr.bf16.mxu0 0
    %589 = vmatpush1.bf16.msra.mxu0 0
    %590 = vmatprep.subr.bf16.mxu0 0
    %591 = vmatpush1.bf16.msra.mxu0 0
    %592 = vmatprep.subr.bf16.mxu0 0
    %593 = vmatpush1.bf16.msra.mxu0 0
    %594 = vmatprep.subr.bf16.mxu0 0
    %595 = vmatpush1.bf16.msra.mxu0 0
    %596 = vmatprep.subr.bf16.mxu0 0
    %597 = vmatpush1.bf16.msra.mxu0 0
    %598 = vmatprep.subr.bf16.mxu0 0
    %599 = vmatpush1.bf16.msra.mxu0 0
    %600 = vmatprep.subr.bf16.mxu0 0
    %601 = vmatpush1.bf16.msra.mxu0 0
    %602 = vmatprep.subr.bf16.mxu0 0
    %603 = vmatpush1.bf16.msra.mxu0 0
    %604 = vmatprep.mubr.bf16.mxu0 0
    %605 = vmatmul.mubr.bf16.gmra.mrb[0].mxu0 %v570
    %v606 = vpop.f32.mrb[0].mxu0
    %v607 = vadd.f32 %v59, %v606
    %v608 = vpop.f32.mrb[0].mxu0
    %v609 = vpop.f32.mrb[0].mxu0
    %v610 = vpop.f32.mrb[0].mxu0
    %611 = vdwg.mxu0
    %v612 = vadd.f32 %v564, %v607
    %v613 = vxor.u32 %v612, 2147483648
    %v614 = vmul.f32 %v613, 1.442695
    %v615 = vpow.pop %v614
    %v616 = vadd.f32 %v615, 1.0
    %v617 = vrcp.pop %v616
    %v618 = vmul.f32 1.0, %v617
    %v621 = vunpack.c.l.s4 1983009808
    %v622 = vunpack.c.0.s8 %v621
    %v623 = vlaneseq
    %v624 = vshrl.u32 %v623, 7
    %v625 = vsub.s32 %v622, %v624
    %v626 = vrot.slane %v607, %v625
    %627 = vrot.lane.b32.xlu0 %v626, 64
    %v628 = vpop.permute.xlu0 %627
    %v630 = vmul.f32 %v618, %v628
    %632 = vrot.lane.b32.xlu0 %v630, 64
    %v633 = vpop.permute.xlu0 %632
    %v635 = vadd.f32 %v564, %v633
    %v636 = vtanh.pop %v635
    %v637 = vsub.f32 1.0, %v618
    %639 = vrot.lane.b32.xlu0 %v636, 96
    %v640 = vpop.permute.xlu0 %639
    %v642 = vmul.f32 %v637, %v640
    %v643 = vmul.f32 %v618, %v548
    %v644 = vadd.f32 %v642, %v643
    %v647 = vunpack.c.l.s4 1983009808
    %v648 = vunpack.c.0.s8 %v647
    %v649 = vlaneseq
    %v650 = vshrl.u32 %v649, 7
    %v651 = vsub.s32 %v648, %v650
    %v652 = vrot.slane %v644, %v651
    %653 = vrot.lane.b32.xlu0 %v652, 96
    %v654 = vpop.permute.xlu0 %653
    %s656 = scalar_lea.vmem [#allocation8], 10
    %657 = vst.msk [vmem:[%s656] sm:$0x3] %vm176, %v654
    %s658 = scalar_lea.vmem [#allocation3], 6
    %v659 = vld [vmem:[%s658] sm:$0x1]
    %v660 = vunpack.c.l.bf16 %v659
    %v661 = vpack.c.bf16 %v644, %v644
    %663 = vrot.lane.b32.xlu0 %v661, 96
    %v664 = vpop.permute.xlu0 %663
    %v666 = vsel %vm77, %v664, 0
    %668 = vmatprep.subr.bf16.mxu0 0
    %669 = vmatpush1.bf16.msra.mxu0 %v73
    %670 = vmatprep.subr.bf16.mxu0 0
    %671 = vmatpush1.bf16.msra.mxu0 %v74
    %672 = vmatprep.subr.bf16.mxu0 0
    %673 = vmatpush1.bf16.msra.mxu0 0
    %674 = vmatprep.subr.bf16.mxu0 0
    %675 = vmatpush1.bf16.msra.mxu0 0
    %676 = vmatprep.subr.bf16.mxu0 0
    %677 = vmatpush1.bf16.msra.mxu0 0
    %678 = vmatprep.subr.bf16.mxu0 0
    %679 = vmatpush1.bf16.msra.mxu0 0
    %680 = vmatprep.subr.bf16.mxu0 0
    %681 = vmatpush1.bf16.msra.mxu0 0
    %682 = vmatprep.subr.bf16.mxu0 0
    %683 = vmatpush1.bf16.msra.mxu0 0
    %684 = vmatprep.subr.bf16.mxu0 0
    %685 = vmatpush1.bf16.msra.mxu0 0
    %686 = vmatprep.subr.bf16.mxu0 0
    %687 = vmatpush1.bf16.msra.mxu0 0
    %688 = vmatprep.subr.bf16.mxu0 0
    %689 = vmatpush1.bf16.msra.mxu0 0
    %690 = vmatprep.subr.bf16.mxu0 0
    %691 = vmatpush1.bf16.msra.mxu0 0
    %692 = vmatprep.subr.bf16.mxu0 0
    %693 = vmatpush1.bf16.msra.mxu0 0
    %694 = vmatprep.subr.bf16.mxu0 0
    %695 = vmatpush1.bf16.msra.mxu0 0
    %696 = vmatprep.subr.bf16.mxu0 0
    %697 = vmatpush1.bf16.msra.mxu0 0
    %698 = vmatprep.subr.bf16.mxu0 0
    %699 = vmatpush1.bf16.msra.mxu0 0
    %700 = vmatprep.mubr.bf16.mxu0 0
    %701 = vmatmul.mubr.bf16.gmra.mrb[0].mxu0 %v666
    %v702 = vpop.f32.mrb[0].mxu0
    %v703 = vadd.f32 %v59, %v702
    %v704 = vpop.f32.mrb[0].mxu0
    %v705 = vpop.f32.mrb[0].mxu0
    %v706 = vpop.f32.mrb[0].mxu0
    %707 = vdwg.mxu0
    %v708 = vadd.f32 %v660, %v703
    %v709 = vxor.u32 %v708, 2147483648
    %v710 = vmul.f32 %v709, 1.442695
    %v711 = vpow.pop %v710
    %v712 = vadd.f32 %v711, 1.0
    %v713 = vrcp.pop %v712
    %v714 = vmul.f32 1.0, %v713
    %v717 = vunpack.c.l.s4 1983009808
    %v718 = vunpack.c.0.s8 %v717
    %v719 = vlaneseq
    %v720 = vshrl.u32 %v719, 7
    %v721 = vsub.s32 %v718, %v720
    %v722 = vrot.slane %v703, %v721
    %723 = vrot.lane.b32.xlu0 %v722, 64
    %v724 = vpop.permute.xlu0 %723
    %v726 = vmul.f32 %v714, %v724
    %728 = vrot.lane.b32.xlu0 %v726, 64
    %v729 = vpop.permute.xlu0 %728
    %v731 = vadd.f32 %v660, %v729
    %v732 = vtanh.pop %v731
    %v733 = vsub.f32 1.0, %v714
    %735 = vrot.lane.b32.xlu0 %v732, 96
    %v736 = vpop.permute.xlu0 %735
    %v738 = vmul.f32 %v733, %v736
    %v739 = vmul.f32 %v714, %v644
    %v740 = vadd.f32 %v738, %v739
    %v743 = vunpack.c.l.s4 1983009808
    %v744 = vunpack.c.0.s8 %v743
    %v745 = vlaneseq
    %v746 = vshrl.u32 %v745, 7
    %v747 = vsub.s32 %v744, %v746
    %v748 = vrot.slane %v740, %v747
    %749 = vrot.lane.b32.xlu0 %v748, 96
    %v750 = vpop.permute.xlu0 %749
    %s752 = scalar_lea.vmem [#allocation8], 12
    %753 = vst.msk [vmem:[%s752] sm:$0x3] %vm176, %v750
    %s754 = scalar_lea.vmem [#allocation3], 7
    %v755 = vld [vmem:[%s754] sm:$0x1]
    %v756 = vunpack.c.l.bf16 %v755
    %v757 = vpack.c.bf16 %v740, %v740
    %759 = vrot.lane.b32.xlu0 %v757, 96
    %v760 = vpop.permute.xlu0 %759
    %v762 = vsel %vm77, %v760, 0
    %764 = vmatprep.subr.bf16.mxu0 0
    %765 = vmatpush1.bf16.msra.mxu0 %v73
    %766 = vmatprep.subr.bf16.mxu0 0
    %767 = vmatpush1.bf16.msra.mxu0 %v74
    %768 = vmatprep.subr.bf16.mxu0 0
    %769 = vmatpush1.bf16.msra.mxu0 0
    %770 = vmatprep.subr.bf16.mxu0 0
    %771 = vmatpush1.bf16.msra.mxu0 0
    %772 = vmatprep.subr.bf16.mxu0 0
    %773 = vmatpush1.bf16.msra.mxu0 0
    %774 = vmatprep.subr.bf16.mxu0 0
    %775 = vmatpush1.bf16.msra.mxu0 0
    %776 = vmatprep.subr.bf16.mxu0 0
    %777 = vmatpush1.bf16.msra.mxu0 0
    %778 = vmatprep.subr.bf16.mxu0 0
    %779 = vmatpush1.bf16.msra.mxu0 0
    %780 = vmatprep.subr.bf16.mxu0 0
    %781 = vmatpush1.bf16.msra.mxu0 0
    %782 = vmatprep.subr.bf16.mxu0 0
    %783 = vmatpush1.bf16.msra.mxu0 0
    %784 = vmatprep.subr.bf16.mxu0 0
    %785 = vmatpush1.bf16.msra.mxu0 0
    %786 = vmatprep.subr.bf16.mxu0 0
    %787 = vmatpush1.bf16.msra.mxu0 0
    %788 = vmatprep.subr.bf16.mxu0 0
    %789 = vmatpush1.bf16.msra.mxu0 0
    %790 = vmatprep.subr.bf16.mxu0 0
    %791 = vmatpush1.bf16.msra.mxu0 0
    %792 = vmatprep.subr.bf16.mxu0 0
    %793 = vmatpush1.bf16.msra.mxu0 0
    %794 = vmatprep.subr.bf16.mxu0 0
    %795 = vmatpush1.bf16.msra.mxu0 0
    %796 = vmatprep.mubr.bf16.mxu0 0
    %797 = vmatmul.mubr.bf16.gmra.mrb[0].mxu0 %v762
    %v798 = vpop.f32.mrb[0].mxu0
    %v799 = vadd.f32 %v59, %v798
    %v800 = vpop.f32.mrb[0].mxu0
    %v801 = vpop.f32.mrb[0].mxu0
    %v802 = vpop.f32.mrb[0].mxu0
    %803 = vdwg.mxu0
    %v804 = vadd.f32 %v756, %v799
    %v805 = vxor.u32 %v804, 2147483648
    %v806 = vmul.f32 %v805, 1.442695
    %v807 = vpow.pop %v806
    %v808 = vadd.f32 %v807, 1.0
    %v809 = vrcp.pop %v808
    %v810 = vmul.f32 1.0, %v809
    %v813 = vunpack.c.l.s4 1983009808
    %v814 = vunpack.c.0.s8 %v813
    %v815 = vlaneseq
    %v816 = vshrl.u32 %v815, 7
    %v817 = vsub.s32 %v814, %v816
    %v818 = vrot.slane %v799, %v817
    %819 = vrot.lane.b32.xlu0 %v818, 64
    %v820 = vpop.permute.xlu0 %819
    %v822 = vmul.f32 %v810, %v820
    %824 = vrot.lane.b32.xlu0 %v822, 64
    %v825 = vpop.permute.xlu0 %824
    %v827 = vadd.f32 %v756, %v825
    %v828 = vtanh.pop %v827
    %v829 = vsub.f32 1.0, %v810
    %831 = vrot.lane.b32.xlu0 %v828, 96
    %v832 = vpop.permute.xlu0 %831
    %v834 = vmul.f32 %v829, %v832
    %v835 = vmul.f32 %v810, %v740
    %v836 = vadd.f32 %v834, %v835
    %v839 = vunpack.c.l.s4 1983009808
    %v840 = vunpack.c.0.s8 %v839
    %v841 = vlaneseq
    %v842 = vshrl.u32 %v841, 7
    %v843 = vsub.s32 %v840, %v842
    %v844 = vrot.slane %v836, %v843
    %845 = vrot.lane.b32.xlu0 %v844, 96
    %v846 = vpop.permute.xlu0 %845
    %s848 = scalar_lea.vmem [#allocation8], 14
    %849 = vst.msk [vmem:[%s848] sm:$0x3] %vm176, %v846
    %850 = vst.msk [vmem:[#allocation2] sm:$0x3] %vm176, %v846
    // Predicated region
    $region26: #{tpu_custom_call.1} parent=1 // pred_check
      _
    $region27: #{tpu_custom_call.1} parent=1 // pred_check_branch
      %852 = sbr.rel (0) target = $region29
    $region28: #{tpu_custom_call.1} parent=1 // pred_region
      %s854 = ssub.s32 256, 256
      %855 = vsyncadd [#allocation5], %s854
      %s856 = sshll.u32 [#allocation8], 4
      %s857 = int_to_ptr.vmem [resolvable:$true] %s856
      %862 = dma.vmem_to_hbm [thread:$0]  %s857, 256, %s3, [#allocation5], 32, 32, 2
    $region29: #{tpu_custom_call.1} parent=1 // pred_fallthru
      _
    // Predicated region
    $region30: #{tpu_custom_call.1} parent=1 // pred_check
      _
    $region31: #{tpu_custom_call.1} parent=1 // pred_check_branch
      %864 = sbr.rel (0) target = $region33
    $region32: #{tpu_custom_call.1} parent=1 // pred_region
      %865 = dma.done [#allocation5], 256
    $region33: #{tpu_custom_call.1} parent=1 // pred_fallthru
      _
    %866 = vsyncpa [#allocation4], 1
    %867 = vsyncpa [#allocation7], 1
    %868 = vsyncpa [#allocation5], 1

</llo_original>
